<compile_context>
chip_gen: v7x
topology: tpu7x:2x2x1
jax: 0.10.0
libtpu: 0.0.40
codegen_flags: <defaults>
</compile_context>

<pallas_src>
import functools

import jax
import jax.numpy as jnp
from jax import lax
from jax.experimental import pallas as pl
from jax.experimental.pallas import tpu as pltpu

LANES = 128
SUBLANES = 8


def _round_up(x, m):
    return ((x + m - 1) // m) * m


def _psum(x, tile_rows):
    """(tile_rows, LANES) f32 -> (SUBLANES, LANES) partial sums (pure VALU adds)."""
    return jnp.sum(x.reshape(tile_rows // SUBLANES, SUBLANES, LANES), axis=0)


# --------------------------------------------------------------------------
# Fast path: everything resident in VMEM, single kernel, |p|+|t| HBM traffic.
# --------------------------------------------------------------------------
def _fused_kernel(scal_ref, p_ref, t_ref, out_ref, *, n_valid):
    shift = scal_ref[0]
    n = float(n_valid)

    t = t_ref[...].astype(jnp.float32)
    p = p_ref[...].astype(jnp.float32)

    # shifted-moment mean/std (lane-padded elements equal `shift` -> contribute 0)
    ts = t - shift
    sum_ts = jnp.sum(ts)
    sum_ts2 = jnp.sum(ts * ts)
    mean_t = shift + sum_ts / n
    var_t = jnp.maximum((sum_ts2 - sum_ts * sum_ts / n) / (n - 1.0), 0.0)
    std_t = jnp.sqrt(var_t)
    thr = mean_t + 0.5 * std_t
    inv = 1.0 / (std_t + 1e-8)

    diff = p - t
    sq = diff * diff
    maskf = jnp.where((t > thr) & (p < t), 1.0, 0.0)
    pen = maskf * (sq * (1.0 + (t - thr) * inv))

    base = jnp.sum(sq) / n
    pen_sum = jnp.sum(pen)
    cnt_sum = jnp.sum(maskf)
    wpen = pen_sum / jnp.maximum(cnt_sum, 1.0)
    out_ref[0] = jnp.where(cnt_sum > 0.0, base + 0.5 * wpen, base)


# --------------------------------------------------------------------------
# Tiled path, pass 1: shifted target moments (per-tile partials, parallel).
# --------------------------------------------------------------------------
def _stats_kernel(scal_ref, t_ref, s1_ref, s2_ref,
                  *, tile_rows, rows, n_tiles, last_partial):
    shift = scal_ref[0]
    ts = t_ref[...].astype(jnp.float32) - shift

    def emit(v):
        s1_ref[0] = _psum(v, tile_rows)
        s2_ref[0] = _psum(v * v, tile_rows)

    if not last_partial:
        emit(ts)
    else:
        i = pl.program_id(0)

        @pl.when(i < n_tiles - 1)
        def _():
            emit(ts)

        @pl.when(i == n_tiles - 1)
        def _():
            row_ids = lax.broadcasted_iota(jnp.int32, (tile_rows, LANES), 0)
            valid = (i * tile_rows + row_ids) < rows
            emit(jnp.where(valid, ts, 0.0))


# --------------------------------------------------------------------------
# Tiled path, pass 2: fused MSE + penalty partials (parallel).
# --------------------------------------------------------------------------
def _penalty_kernel(scal_ref, p_ref, t_ref, sq_ref, pen_ref, cnt_ref,
                    *, tile_rows, rows, n_tiles, last_partial):
    thr = scal_ref[0]
    inv = scal_ref[1]
    c = scal_ref[2]            # 1 - thr*inv  =>  load_weight = t*inv + c
    p = p_ref[...].astype(jnp.float32)
    t = t_ref[...].astype(jnp.float32)

    def emit(p_, t_):
        diff = p_ - t_
        sq = diff * diff
        maskf = jnp.where((t_ > thr) & (p_ < t_), 1.0, 0.0)
        sq_ref[0] = _psum(sq, tile_rows)
        pen_ref[0] = _psum(maskf * (sq * (t_ * inv + c)), tile_rows)
        cnt_ref[0] = _psum(maskf, tile_rows)

    if not last_partial:
        emit(p, t)
    else:
        i = pl.program_id(0)

        @pl.when(i < n_tiles - 1)
        def _():
            emit(p, t)

        @pl.when(i == n_tiles - 1)
        def _():
            row_ids = lax.broadcasted_iota(jnp.int32, (tile_rows, LANES), 0)
            valid = (i * tile_rows + row_ids) < rows
            emit(jnp.where(valid, p, 0.0), jnp.where(valid, t, 0.0))


# --------------------------------------------------------------------------
# Wrapper
# --------------------------------------------------------------------------
def energy_aware_loss(predictions, targets, *, tile_rows=2048,
                      max_fast_path_elems=1 << 20):
    """predictions, targets: arrays of identical shape (any rank, any float dtype)."""
    assert predictions.shape == targets.shape
    n_valid = int(predictions.size)
    assert n_valid > 1, "need at least 2 elements (unbiased std uses N-1)"
    n_f = float(n_valid)

    p_flat = predictions.reshape(-1)
    t_flat = targets.reshape(-1)
    if p_flat.dtype != t_flat.dtype:
        # rare mixed-dtype case: promote so the pad value is exact in both
        p_flat = p_flat.astype(jnp.float32)
        t_flat = t_flat.astype(jnp.float32)

    # scalar shift for shifted-moment variance; also the (harmless) pad value
    shift_t = t_flat[:1]                       # (1,), native dtype
    shift = shift_t.astype(jnp.float32)        # (1,) f32, exact widening

    rows = pl.cdiv(n_valid, LANES)
    if rows * LANES != n_valid:
        # already padding -> make the row count sublane-aligned for free
        rows = _round_up(rows, SUBLANES)
    padded = rows * LANES
    if padded != n_valid:
        pad = padded - n_valid
        t_flat = jnp.concatenate(
            [t_flat, jnp.broadcast_to(shift_t, (pad,))])
        p_flat = jnp.concatenate(
            [p_flat, jnp.broadcast_to(shift_t.astype(p_flat.dtype), (pad,))])
    p2d = p_flat.reshape(rows, LANES)
    t2d = t_flat.reshape(rows, LANES)

    p_item = p2d.dtype.itemsize
    t_item = t2d.dtype.itemsize
    in_bytes = padded * (p_item + t_item)

    # ------------------------- fast path -------------------------
    if padded <= int(max_fast_path_elems) or rows < 4 * SUBLANES:
        vmem_limit = int(min(60 << 20, max(32 << 20, in_bytes + 32 * padded)))
        out = pl.pallas_call(
            functools.partial(_fused_kernel, n_valid=n_valid),
            out_shape=jax.ShapeDtypeStruct((1,), jnp.float32),
            in_specs=[
                pl.BlockSpec(memory_space=pltpu.SMEM),
                pl.BlockSpec(memory_space=pltpu.VMEM),
                pl.BlockSpec(memory_space=pltpu.VMEM),
            ],
            out_specs=pl.BlockSpec(memory_space=pltpu.SMEM),
            compiler_params=pltpu.CompilerParams(vmem_limit_bytes=vmem_limit),
            cost_estimate=pl.CostEstimate(
                flops=15 * n_valid, transcendentals=0,
                bytes_accessed=in_bytes + 16),
        )(shift, p2d, t2d)
        return out[0]

    # ------------------------- tiled path -------------------------
    tile_rows = int(tile_rows)
    tile_rows = max(SUBLANES, (min(tile_rows, rows) // SUBLANES) * SUBLANES)
    n_tiles = pl.cdiv(rows, tile_rows)
    last_partial = (rows % tile_rows) != 0

    vmem_limit = int(min(
        60 << 20,
        max(32 << 20,
            2 * tile_rows * LANES * (p_item + t_item) + 32 * tile_rows * LANES)))

    part_shape = jax.ShapeDtypeStruct((n_tiles, SUBLANES, LANES), jnp.float32)
    part_spec = pl.BlockSpec((1, SUBLANES, LANES), lambda i: (i, 0, 0))
    data_spec = pl.BlockSpec((tile_rows, LANES), lambda i: (i, 0))
    smem_spec = pl.BlockSpec(memory_space=pltpu.SMEM)

    # pass 1: target statistics (t streamed once, parallel across tiles/cores)
    s1, s2 = pl.pallas_call(
        functools.partial(_stats_kernel, tile_rows=tile_rows, rows=rows,
                          n_tiles=n_tiles, last_partial=last_partial),
        out_shape=(part_shape, part_shape),
        grid=(n_tiles,),
        in_specs=[smem_spec, data_spec],
        out_specs=(part_spec, part_spec),
        compiler_params=pltpu.CompilerParams(
            dimension_semantics=("parallel",),
            vmem_limit_bytes=vmem_limit),
        cost_estimate=pl.CostEstimate(
            flops=4 * n_valid, transcendentals=0,
            bytes_accessed=padded * t_item
            + 2 * n_tiles * SUBLANES * LANES * 4),
    )(shift, t2d)

    sum_ts = jnp.sum(s1)
    sum_ts2 = jnp.sum(s2)
    mean_t = shift[0] + sum_ts / n_f
    var_t = jnp.maximum((sum_ts2 - sum_ts * sum_ts / n_f) / (n_f - 1.0), 0.0)
    std_t = jnp.sqrt(var_t)
    thr = mean_t + 0.5 * std_t
    inv = 1.0 / (std_t + 1e-8)
    coefs = jnp.stack([thr, inv, 1.0 - thr * inv]).astype(jnp.float32)

    # pass 2: fused base-MSE + penalty partials (parallel across tiles/cores)
    sqp, penp, cntp = pl.pallas_call(
        functools.partial(_penalty_kernel, tile_rows=tile_rows, rows=rows,
                          n_tiles=n_tiles, last_partial=last_partial),
        out_shape=(part_shape, part_shape, part_shape),
        grid=(n_tiles,),
        in_specs=[smem_spec, data_spec, data_spec],
        out_specs=(part_spec, part_spec, part_spec),
        compiler_params=pltpu.CompilerParams(
            dimension_semantics=("parallel",),
            vmem_limit_bytes=vmem_limit),
        cost_estimate=pl.CostEstimate(
            flops=12 * n_valid, transcendentals=0,
            bytes_accessed=padded * (p_item + t_item)
            + 3 * n_tiles * SUBLANES * LANES * 4),
    )(coefs, p2d, t2d)

    base = jnp.sum(sqp) / n_f
    pen_sum = jnp.sum(penp)
    cnt_sum = jnp.sum(cntp)
    wpen = pen_sum / jnp.maximum(cnt_sum, 1.0)
    return jnp.where(cnt_sum > 0.0, base + 0.5 * wpen, base)


# --------------------------------------------------------------------------
# Pure-JAX reference of the same semantics (for verification only)
# --------------------------------------------------------------------------
def _reference(predictions, targets):
    p = predictions.astype(jnp.float32).reshape(-1)
    t = targets.astype(jnp.float32).reshape(-1)
    n = p.size
    base = jnp.mean((p - t) ** 2)
    mean_t = jnp.mean(t)
    std_t = jnp.sqrt(jnp.sum((t - mean_t) ** 2) / (n - 1))
    thr = mean_t + 0.5 * std_t
    mask = (t > thr) & (p < t)
    lw = 1.0 + jnp.maximum(t - thr, 0.0) / (std_t + 1e-8)
    pen = (p - t) ** 2 * lw
    cnt = jnp.sum(mask.astype(jnp.float32))
    wpen = jnp.sum(jnp.where(mask, pen, 0.0)) / jnp.maximum(cnt, 1.0)
    return jnp.where(cnt > 0, base + 0.5 * wpen, base)


if __name__ == "__main__":
    key = jax.random.PRNGKey(0)
    k1, k2, k3, k4 = jax.random.split(key, 4)

    # Case 1: small NCHW regression tensors (fused single-block fast path).
    shape1 = (2, 4, 16, 16)
    p1 = jax.random.normal(k1, shape1, dtype=jnp.float32)
    t1 = jax.random.normal(k2, shape1, dtype=jnp.float32) * 0.8 + 0.1
    out1 = energy_aware_loss(p1, t1)
    jax.block_until_ready(out1)
    ref1 = _reference(p1, t1)
    assert jnp.allclose(out1, ref1, rtol=2e-4, atol=1e-6), (out1, ref1)

    # Case 2: ragged size (N % 128 != 0), large mean / small std — exercises
    # lane padding and the shifted-moment variance; still fast path.
    shape2 = (4, 4, 50, 50)
    z = jax.random.normal(k3, shape2, dtype=jnp.float32)
    t2 = 10.0 + 0.05 * jnp.round(4.0 * z) / 4.0      # quantized: no threshold ambiguity
    p2 = t2 + 0.1 * jax.random.normal(k4, shape2, dtype=jnp.float32)
    out2 = energy_aware_loss(p2, t2)
    jax.block_until_ready(out2)
    ref2 = _reference(p2, t2)
    assert jnp.allclose(out2, ref2, rtol=1e-3, atol=1e-5), (out2, ref2)

    # Case 3: same data through the tiled two-pass path (partial final block,
    # core-parallel grid) by disabling the fast path.
    out3 = energy_aware_loss(p2, t2, tile_rows=128, max_fast_path_elems=0)
    jax.block_until_ready(out3)
    assert jnp.allclose(out3, ref2, rtol=1e-3, atol=1e-5), (out3, ref2)

    print("KERNEL_OK")
</pallas_src>

<mosaic_0001>
module attributes {stable_mosaic.version = 11 : i64} {
  func.func @_fused_kernel(%arg0: memref<1xf32, #tpu.memory_space<smem>>, %arg1: memref<16x128xf32, #tpu.memory_space<vmem>>, %arg2: memref<16x128xf32, #tpu.memory_space<vmem>>, %arg3: memref<1xf32, #tpu.memory_space<smem>>) attributes {dimension_semantics = [], scalar_prefetch = 0 : i64, scratch_operands = 0 : i64, tpu.core_type = #tpu.core_type<tc>} {
    %c0 = arith.constant 0 : index
    %0 = memref.load %arg0[%c0] : memref<1xf32, #tpu.memory_space<smem>>
    %c0_0 = arith.constant 0 : index
    %c0_1 = arith.constant 0 : index
    %1 = vector.load %arg2[%c0_0, %c0_1] : memref<16x128xf32, #tpu.memory_space<vmem>>, vector<16x128xf32>
    %c0_2 = arith.constant 0 : index
    %c0_3 = arith.constant 0 : index
    %2 = vector.load %arg1[%c0_2, %c0_3] : memref<16x128xf32, #tpu.memory_space<vmem>>, vector<16x128xf32>
    %3 = vector.broadcast %0 : f32 to vector<16x128xf32>
    %4 = arith.subf %1, %3 : vector<16x128xf32>
    %5 = vector.shape_cast %4 : vector<16x128xf32> to vector<1x16x128xf32>
    %cst = arith.constant dense<0.000000e+00> : vector<1xf32>
    %6 = vector.multi_reduction <add>, %5, %cst [1, 2] : vector<1x16x128xf32> to vector<1xf32>
    %7 = vector.shape_cast %6 : vector<1xf32> to vector<1x1x1xf32>
    %8 = vector.extract %7[0, 0, 0] : f32 from vector<1x1x1xf32>
    %9 = arith.mulf %4, %4 : vector<16x128xf32>
    %10 = vector.shape_cast %9 : vector<16x128xf32> to vector<1x16x128xf32>
    %cst_4 = arith.constant dense<0.000000e+00> : vector<1xf32>
    %11 = vector.multi_reduction <add>, %10, %cst_4 [1, 2] : vector<1x16x128xf32> to vector<1xf32>
    %12 = vector.shape_cast %11 : vector<1xf32> to vector<1x1x1xf32>
    %13 = vector.extract %12[0, 0, 0] : f32 from vector<1x1x1xf32>
    %cst_5 = arith.constant 2.048000e+03 : f32
    %14 = arith.divf %8, %cst_5 : f32
    %15 = arith.addf %0, %14 : f32
    %16 = arith.mulf %8, %8 : f32
    %cst_6 = arith.constant 2.048000e+03 : f32
    %17 = arith.divf %16, %cst_6 : f32
    %18 = arith.subf %13, %17 : f32
    %cst_7 = arith.constant 2.047000e+03 : f32
    %19 = arith.divf %18, %cst_7 : f32
    %cst_8 = arith.constant 0.000000e+00 : f32
    %20 = arith.maximumf %19, %cst_8 : f32
    %21 = math.sqrt %20 : f32
    %cst_9 = arith.constant 5.000000e-01 : f32
    %22 = arith.mulf %cst_9, %21 : f32
    %23 = arith.addf %15, %22 : f32
    %cst_10 = arith.constant 9.99999993E-9 : f32
    %24 = arith.addf %21, %cst_10 : f32
    %cst_11 = arith.constant 1.000000e+00 : f32
    %25 = arith.divf %cst_11, %24 : f32
    %26 = arith.subf %2, %1 : vector<16x128xf32>
    %27 = arith.mulf %26, %26 : vector<16x128xf32>
    %28 = vector.broadcast %23 : f32 to vector<16x128xf32>
    %29 = arith.cmpf ogt, %1, %28 : vector<16x128xf32>
    %30 = arith.cmpf olt, %2, %1 : vector<16x128xf32>
    %31 = arith.andi %29, %30 : vector<16x128xi1>
    %cst_12 = arith.constant 1.000000e+00 : f32
    %cst_13 = arith.constant 0.000000e+00 : f32
    %32 = vector.broadcast %cst_12 : f32 to vector<16x128xf32>
    %33 = vector.broadcast %cst_13 : f32 to vector<16x128xf32>
    %34 = arith.select %31, %32, %33 : vector<16x128xi1>, vector<16x128xf32>
    %35 = vector.broadcast %23 : f32 to vector<16x128xf32>
    %36 = arith.subf %1, %35 : vector<16x128xf32>
    %37 = vector.broadcast %25 : f32 to vector<16x128xf32>
    %38 = arith.mulf %36, %37 : vector<16x128xf32>
    %cst_14 = arith.constant 1.000000e+00 : f32
    %39 = vector.broadcast %cst_14 : f32 to vector<16x128xf32>
    %40 = arith.addf %39, %38 : vector<16x128xf32>
    %41 = arith.mulf %27, %40 : vector<16x128xf32>
    %42 = arith.mulf %34, %41 : vector<16x128xf32>
    %43 = vector.shape_cast %27 : vector<16x128xf32> to vector<1x16x128xf32>
    %cst_15 = arith.constant dense<0.000000e+00> : vector<1xf32>
    %44 = vector.multi_reduction <add>, %43, %cst_15 [1, 2] : vector<1x16x128xf32> to vector<1xf32>
    %45 = vector.shape_cast %44 : vector<1xf32> to vector<1x1x1xf32>
    %46 = vector.extract %45[0, 0, 0] : f32 from vector<1x1x1xf32>
    %cst_16 = arith.constant 2.048000e+03 : f32
    %47 = arith.divf %46, %cst_16 : f32
    %48 = vector.shape_cast %42 : vector<16x128xf32> to vector<1x16x128xf32>
    %cst_17 = arith.constant dense<0.000000e+00> : vector<1xf32>
    %49 = vector.multi_reduction <add>, %48, %cst_17 [1, 2] : vector<1x16x128xf32> to vector<1xf32>
    %50 = vector.shape_cast %49 : vector<1xf32> to vector<1x1x1xf32>
    %51 = vector.extract %50[0, 0, 0] : f32 from vector<1x1x1xf32>
    %52 = vector.shape_cast %34 : vector<16x128xf32> to vector<1x16x128xf32>
    %cst_18 = arith.constant dense<0.000000e+00> : vector<1xf32>
    %53 = vector.multi_reduction <add>, %52, %cst_18 [1, 2] : vector<1x16x128xf32> to vector<1xf32>
    %54 = vector.shape_cast %53 : vector<1xf32> to vector<1x1x1xf32>
    %55 = vector.extract %54[0, 0, 0] : f32 from vector<1x1x1xf32>
    %cst_19 = arith.constant 1.000000e+00 : f32
    %56 = arith.maximumf %55, %cst_19 : f32
    %57 = arith.divf %51, %56 : f32
    %cst_20 = arith.constant 0.000000e+00 : f32
    %58 = arith.cmpf ogt, %55, %cst_20 : f32
    %cst_21 = arith.constant 5.000000e-01 : f32
    %59 = arith.mulf %cst_21, %57 : f32
    %60 = arith.addf %47, %59 : f32
    %61 = arith.select %58, %60, %47 : f32
    %c0_22 = arith.constant 0 : index
    %62 = memref.load %arg3[%c0_22] : memref<1xf32, #tpu.memory_space<smem>>
    memref.store %61, %arg3[%c0_22] : memref<1xf32, #tpu.memory_space<smem>>
    return
  }
}

</mosaic_0001>

<llo_original>
// kernel: tpu_custom_call.1
$region0: #{tpu_custom_call.1}
  #allocation0 [shape = 'u32[]', space=smem, size = 0x4, offset = 0x4, fixed_abs, tag = 'smem constant byte address 0x4 - core index']
  #allocation1 [shape = 'u32[144,128]{1,0:T(1,128)}', space=vmem, size = 0x12000, scoped, tag = 'internal scratch']
  #allocation2 [shape = 'f32[1]{0:T(128)S(6)}', space=smem, size = 0x200, scoped, tag = 'scoped memory for tpu_custom_call.1']
  %s0 = inlined_call_operand.<no memory space> [shape: f32[1], index: 0, kind: input, shape index: {}]
  %s1 = inlined_call_operand.hbm [shape: f32[16,128], index: 1, kind: input, shape index: {}]
  %s2 = inlined_call_operand.hbm [shape: f32[16,128], index: 2, kind: input, shape index: {}]
  %s3 = inlined_call_operand.hbm [shape: f32[1], index: 3, kind: output, shape index: {}]
  %s4 = sld [smem:[#allocation0]]
  $region30: #{tpu_custom_call.1} parent=0
    _
  %s6 = ssub.s32 1, %s4
  %s7 = scalar_select 0, %s6, %s4
  %8 = sst [smem:[#allocation2]] %s0
  $region1: #{tpu_custom_call.1} parent=0
    #allocation3 [shape = 'u8[8192]{0}', space=vmem, size = 0x2000, scoped, tag = 'input window, operand 1, single buffered']
    #allocation4 [shape = 's32[1]{0}', space=sflag, size = 0x4, scoped, tag = 'scoped memory for tpu_custom_call.1']
    #allocation5 [shape = 's32[1]{0}', space=sflag, size = 0x4, scoped, tag = 'scoped memory for tpu_custom_call.1']
    #allocation6 [shape = 'u8[8192]{0}', space=vmem, size = 0x2000, scoped, tag = 'input window, operand 2, single buffered']
    #allocation7 [shape = 's32[1]{0}', space=sflag, size = 0x4, scoped, tag = 'scoped memory for tpu_custom_call.1']
    #allocation8 [shape = 'u8[512]{0}', space=smem, size = 0x200, scoped, tag = 'output window, operand 0, single buffered']
    %9 = vsyncpa [#allocation4], 0
    %10 = vsyncpa [#allocation7], 0
    %11 = vsyncpa [#allocation5], 0
    // Predicated region
    $region2: #{tpu_custom_call.1} parent=1 // pred_check
      _
    $region3: #{tpu_custom_call.1} parent=1 // pred_check_branch
      %13 = sbr.rel (0) target = $region5
    $region4: #{tpu_custom_call.1} parent=1 // pred_region
      _
    $region5: #{tpu_custom_call.1} parent=1 // pred_fallthru
      _
    // Predicated region
    $region6: #{tpu_custom_call.1} parent=1 // pred_check
      _
    $region7: #{tpu_custom_call.1} parent=1 // pred_check_branch
      %15 = sbr.rel (0) target = $region9
    $region8: #{tpu_custom_call.1} parent=1 // pred_region
      %s17 = ssub.s32 256, 256
      %18 = vsyncadd [#allocation4], %s17
      %s19 = sshll.u32 [#allocation3], 4
      %s20 = int_to_ptr.vmem [resolvable:$true] %s19
      %25 = dma.hbm_to_vmem [thread:$0]  %s1, 256, %s20, [#allocation4], 128, 128, 8
    $region9: #{tpu_custom_call.1} parent=1 // pred_fallthru
      _
    // Predicated region
    $region10: #{tpu_custom_call.1} parent=1 // pred_check
      _
    $region11: #{tpu_custom_call.1} parent=1 // pred_check_branch
      %27 = sbr.rel (0) target = $region13
    $region12: #{tpu_custom_call.1} parent=1 // pred_region
      %s29 = ssub.s32 256, 256
      %30 = vsyncadd [#allocation7], %s29
      %s31 = sshll.u32 [#allocation6], 4
      %s32 = int_to_ptr.vmem [resolvable:$true] %s31
      %37 = dma.hbm_to_vmem [thread:$0]  %s2, 256, %s32, [#allocation7], 128, 128, 8
    $region13: #{tpu_custom_call.1} parent=1 // pred_fallthru
      _
    // Predicated region
    $region14: #{tpu_custom_call.1} parent=1 // pred_check
      _
    $region15: #{tpu_custom_call.1} parent=1 // pred_check_branch
      %39 = sbr.rel (0) target = $region17
    $region16: #{tpu_custom_call.1} parent=1 // pred_region
      %40 = dma.done [#allocation4], 256
    $region17: #{tpu_custom_call.1} parent=1 // pred_fallthru
      _
    // Predicated region
    $region18: #{tpu_custom_call.1} parent=1 // pred_check
      _
    $region19: #{tpu_custom_call.1} parent=1 // pred_check_branch
      %42 = sbr.rel (0) target = $region21
    $region20: #{tpu_custom_call.1} parent=1 // pred_region
      %43 = dma.done [#allocation7], 256
    $region21: #{tpu_custom_call.1} parent=1 // pred_fallthru
      _
    %s44 = sld [smem:[#allocation2]]
    %v45 = vld [vmem:[#allocation6] sm:$0xff]
    %v46 = vld [vmem:[#allocation6 + $0x8] sm:$0xff]
    %v47 = vld [vmem:[#allocation3] sm:$0xff]
    %v48 = vld [vmem:[#allocation3 + $0x8] sm:$0xff]
    %v49 = vstv %s44
    %v50 = vsub.f32 %v45, %v49
    %v51 = vsub.f32 %v46, %v49
    %v52 = vadd.f32 %v50, %v51
    %53 = vadd.xlane.f32.xlu0 %v52
    %v54 = vpop.xlane.xlu0 %53
    %v55 = vrot.slane %v54, 4
    %v56 = vadd.f32 %v54, %v55
    %v57 = vrot.slane %v56, 2
    %v58 = vadd.f32 %v56, %v57
    %v59 = vrot.slane %v58, 1
    %v60 = vadd.f32 %v58, %v59
    %s61 = vtos %v60
    %v62 = vmul.f32 %v50, %v50
    %v63 = vmul.f32 %v51, %v51
    %v64 = vadd.f32 %v62, %v63
    %65 = vadd.xlane.f32.xlu0 %v64
    %v66 = vpop.xlane.xlu0 %65
    %v67 = vrot.slane %v66, 4
    %v68 = vadd.f32 %v66, %v67
    %v69 = vrot.slane %v68, 2
    %v70 = vadd.f32 %v68, %v69
    %v71 = vrot.slane %v70, 1
    %v72 = vadd.f32 %v70, %v71
    %s73 = vtos %v72
    %v74 = vrcp.pop 2048.0
    %s75 = vtos %v74
    %s76 = smul.f32 %s61, %s75
    %s77 = sadd.f32 %s44, %s76
    %s78 = smul.f32 %s61, %s61
    %v79 = vrcp.pop 2048.0
    %s80 = vtos %v79
    %s81 = smul.f32 %s78, %s80
    %s82 = ssub.f32 %s73, %s81
    %v83 = vrcp.pop 2047.0
    %s84 = vtos %v83
    %s85 = smul.f32 %s82, %s84
    %s86 = smax.f32 %s85, 0.0
    %v87 = vstv %s86
    %v88 = vrsqrt.pop %v87
    %v89 = vmul.f32 %v87, %v88
    %vm90 = vcmp.eq.f32.partialorder %v87, inf
    %v91 = vsel %vm90, %v87, %v89
    %vm92 = vcmp.eq.f32.partialorder %v87, 0.0
    %v93 = vand.u32 %v87, 2147483648
    %v94 = vsel %vm92, %v93, %v91
    %s95 = vtos %v94
    %s96 = smul.f32 %s95, 0.5
    %s97 = sadd.f32 %s77, %s96
    %s98 = sadd.f32 %s95, 1e-08
    %v99 = vstv %s98
    %v100 = vrcp.pop %v99
    %s101 = vtos %v100
    %v102 = vsub.f32 %v47, %v45
    %v103 = vsub.f32 %v48, %v46
    %v104 = vmul.f32 %v102, %v102
    %v105 = vmul.f32 %v103, %v103
    %v106 = vstv %s97
    %vm107 = vcmp.gt.f32.partialorder %v45, %v106
    %vm108 = vcmp.gt.f32.partialorder %v46, %v106
    %vm109 = vcmp.lt.f32.partialorder %v47, %v45
    %vm110 = vcmp.lt.f32.partialorder %v48, %v46
    %vm111 = vmand %vm107, %vm109
    %vm112 = vmand %vm108, %vm110
    %v113 = vsel %vm111, 1.0, 0.0
    %v114 = vsel %vm112, 1.0, 0.0
    %v115 = vsub.f32 %v45, %v106
    %v116 = vsub.f32 %v46, %v106
    %v117 = vstv %s101
    %v118 = vmul.f32 %v115, %v117
    %v119 = vmul.f32 %v116, %v117
    %v120 = vadd.f32 %v118, 1.0
    %v121 = vadd.f32 %v119, 1.0
    %v122 = vmul.f32 %v104, %v120
    %v123 = vmul.f32 %v105, %v121
    %v124 = vmul.f32 %v113, %v122
    %v125 = vmul.f32 %v114, %v123
    %v126 = vadd.f32 %v104, %v105
    %127 = vadd.xlane.f32.xlu0 %v126
    %v128 = vpop.xlane.xlu0 %127
    %v129 = vrot.slane %v128, 4
    %v130 = vadd.f32 %v128, %v129
    %v131 = vrot.slane %v130, 2
    %v132 = vadd.f32 %v130, %v131
    %v133 = vrot.slane %v132, 1
    %v134 = vadd.f32 %v132, %v133
    %s135 = vtos %v134
    %v136 = vrcp.pop 2048.0
    %s137 = vtos %v136
    %s138 = smul.f32 %s135, %s137
    %v139 = vadd.f32 %v124, %v125
    %140 = vadd.xlane.f32.xlu0 %v139
    %v141 = vpop.xlane.xlu0 %140
    %v142 = vrot.slane %v141, 4
    %v143 = vadd.f32 %v141, %v142
    %v144 = vrot.slane %v143, 2
    %v145 = vadd.f32 %v143, %v144
    %v146 = vrot.slane %v145, 1
    %v147 = vadd.f32 %v145, %v146
    %s148 = vtos %v147
    %v149 = vadd.f32 %v113, %v114
    %150 = vadd.xlane.f32.xlu0 %v149
    %v151 = vpop.xlane.xlu0 %150
    %v152 = vrot.slane %v151, 4
    %v153 = vadd.f32 %v151, %v152
    %v154 = vrot.slane %v153, 2
    %v155 = vadd.f32 %v153, %v154
    %v156 = vrot.slane %v155, 1
    %v157 = vadd.f32 %v155, %v156
    %s158 = vtos %v157
    %s159 = smax.f32 %s158, 1.0
    %v160 = vstv %s159
    %v161 = vrcp.pop %v160
    %s162 = vtos %v161
    %s163 = smul.f32 %s148, %s162
    %p164 = scmp.gt.f32.partialorder %s158, 0.0
    %s165 = smul.f32 %s163, 0.5
    %s166 = sadd.f32 %s138, %s165
    %s167 = scalar_select %p164, %s166, %s138
    %s168 = scalar_lea.smem [#allocation8], 0
    %169 = sst [smem:[%s168]] %s167
    // Predicated region
    $region22: #{tpu_custom_call.1} parent=1 // pred_check
      _
    $region23: #{tpu_custom_call.1} parent=1 // pred_check_branch
      %171 = sbr.rel (0) target = $region25
    $region24: #{tpu_custom_call.1} parent=1 // pred_region
      %s173 = ssub.s32 16, 16
      %174 = vsyncadd [#allocation5], %s173
      %177 = dma.smem_to_hbm [#allocation8], 16, %s3, [#allocation5]
    $region25: #{tpu_custom_call.1} parent=1 // pred_fallthru
      _
    // Predicated region
    $region26: #{tpu_custom_call.1} parent=1 // pred_check
      _
    $region27: #{tpu_custom_call.1} parent=1 // pred_check_branch
      %179 = sbr.rel (0) target = $region29
    $region28: #{tpu_custom_call.1} parent=1 // pred_region
      %180 = dma.done [#allocation5], 16
    $region29: #{tpu_custom_call.1} parent=1 // pred_fallthru
      _
    %181 = sfence
    %182 = vsyncpa [#allocation4], 1
    %183 = vsyncpa [#allocation7], 1
    %184 = vsyncpa [#allocation5], 1

</llo_original>
